<compile_context>
chip_gen: v7x
topology: tpu7x:2x2x1
jax: 0.10.0
libtpu: 0.0.40
codegen_flags: <defaults>
</compile_context>

<pallas_src>
import functools

import jax
import jax.numpy as jnp
from jax.experimental import pallas as pl
from jax.experimental.pallas import tpu as pltpu

EPS = 1e-5


def _double_conv_kernel(x_ref, bw1_ref, g1_ref, be1_ref,
                        bw2_ref, g2_ref, be2_ref, o_ref,
                        *, n, h, w, cin, cout, use_bf16_mxu):
    # x_ref:   (N, H, W*Cin)         input, NHWC with (W, C) flattened on lanes
    # bw1_ref: (3*W*Cin,  W*Cout)    banded conv1 weights (dy-major along K)
    # bw2_ref: (3*W*Cout, W*Cout)    banded conv2 weights
    # g*_ref / be*_ref: (1, W*Cout)  gamma / beta tiled over the W groups
    # o_ref:   (N*H, W*Cout)         lane-dense output view
    nh = n * h
    wcout = w * cout
    inv_count = 1.0 / float(n * h * w)
    op_dt = jnp.bfloat16 if use_bf16_mxu else jnp.float32

    # Channel-selector matrix S[(w,c),(w',c')] = (c == c'), generated in-kernel
    # (removes ~64 KB of HBM traffic vs DMA'ing it as an input).
    ri = jax.lax.broadcasted_iota(jnp.int32, (wcout, wcout), 0)
    ci = jax.lax.broadcasted_iota(jnp.int32, (wcout, wcout), 1)
    s_mat = ((ri % cout) == (ci % cout)).astype(jnp.float32)

    def build_a(src, k):
        # Stage the three H-shifted views of src (N, H, k) side by side along
        # the K/lane axis; the top/bottom 'same' zero padding is the single
        # zero border row concatenated per shifted slab.
        zero_row = jnp.zeros((n, 1, k), src.dtype)
        x_up = jnp.concatenate([zero_row, src[:, :h - 1, :]], axis=1)  # row y-1
        x_dn = jnp.concatenate([src[:, 1:, :], zero_row], axis=1)      # row y+1
        a = jnp.concatenate([x_up, src, x_dn], axis=2)                 # (N,H,3k)
        return a.reshape(nh, 3 * k)

    def conv_bn_relu(a, bw_ref, g_ref, be_ref):
        # 3x3 conv == ONE MXU matmul: (N*H, 3*W*Cin) @ (3*W*Cin, W*Cout),
        # landing directly in the lane-dense (N*H, W*Cout=128) layout.
        acc = jnp.dot(a, bw_ref[...], preferred_element_type=jnp.float32)

        # Training-mode BN (biased variance over N,H,W).  Reduce over rows
        # first (M=1), then over the W groups of the lane axis with an M=1
        # MXU matmul against S.  Two-pass variance for numerical robustness.
        col_sum = jnp.sum(acc, axis=0, keepdims=True)                # (1,WCout)
        mean = jnp.dot(col_sum, s_mat,
                       preferred_element_type=jnp.float32) * inv_count
        centered = acc - mean
        var_col = jnp.sum(centered * centered, axis=0, keepdims=True)
        var = jnp.dot(var_col, s_mat,
                      preferred_element_type=jnp.float32) * inv_count
        y = centered * jax.lax.rsqrt(var + EPS) * g_ref[...] + be_ref[...]
        return jnp.maximum(y, 0.0)

    # ---- conv1 + bn1 + relu ----
    a1 = build_a(x_ref[...].astype(op_dt), w * cin)
    h1 = conv_bn_relu(a1, bw1_ref, g1_ref, be1_ref)          # (N*H, W*Cout) f32

    # ---- conv2 + bn2 + relu ----
    a2 = build_a(h1.reshape(n, h, wcout).astype(op_dt), wcout)
    out = conv_bn_relu(a2, bw2_ref, g2_ref, be2_ref)
    o_ref[...] = out.astype(o_ref.dtype)


def _banded_weights(w_hwio, w_spatial):
    """(3, 3, Cin, Cout) HWIO -> (3*W*Cin, W*Cout) single-matmul banded weight.

    bw[dy*W*Cin + wx*Cin + ci, w*Cout + co] = w_hwio[dy, wx-w+1, ci, co] when
    |wx - w| <= 1, else 0.  Encodes the 3-tap stencil along W and the 'same'
    zero padding at the left/right borders (weight-layout plumbing, done once
    in the wrapper).  dy-major K ordering matches the in-kernel A staging.
    """
    _, _, cin, cout = w_hwio.shape
    d = jnp.arange(w_spatial)[:, None] - jnp.arange(w_spatial)[None, :] + 1
    valid = (d >= 0) & (d <= 2)
    wt = w_hwio[:, jnp.clip(d, 0, 2), :, :]              # (3, W, W, Cin, Cout)
    wt = jnp.where(valid[None, :, :, None, None], wt, 0.0)
    wt = wt.transpose(0, 1, 3, 2, 4).reshape(3, w_spatial * cin,
                                             w_spatial * cout)
    return wt.reshape(3 * w_spatial * cin, w_spatial * cout)


def double_conv(x_nchw, w1, g1, b1, w2, g2, b2, *, use_bf16_mxu=False):
    """x_nchw: (N, Cin, H, W). Conv weights HWIO. Returns (N, Cout, H, W)."""
    n, cin, h, w = x_nchw.shape
    cout = w1.shape[-1]
    wcin, wcout = w * cin, w * cout
    op_dt = jnp.bfloat16 if use_bf16_mxu else jnp.float32

    # Layout plumbing only (nothing padded is materialized in HBM):
    # NCHW -> NHWC -> (N, H, W*Cin) so (W, C) sits on the TPU lane axis.
    x2 = jnp.transpose(x_nchw, (0, 2, 3, 1)).reshape(n, h, wcin)

    # Pre-cast banded weights to the MXU operand dtype in the wrapper (halves
    # the dominant weight HBM bytes on the bf16 path).
    bw1 = _banded_weights(w1, w).astype(op_dt)           # (3*W*Cin,  W*Cout)
    bw2 = _banded_weights(w2, w).astype(op_dt)           # (3*W*Cout, W*Cout)
    g1t = jnp.tile(g1, w).reshape(1, wcout).astype(jnp.float32)
    b1t = jnp.tile(b1, w).reshape(1, wcout).astype(jnp.float32)
    g2t = jnp.tile(g2, w).reshape(1, wcout).astype(jnp.float32)
    b2t = jnp.tile(b2, w).reshape(1, wcout).astype(jnp.float32)

    kernel = functools.partial(_double_conv_kernel, n=n, h=h, w=w,
                               cin=cin, cout=cout, use_bf16_mxu=use_bf16_mxu)

    # Single VMEM-resident invocation (no grid): total footprint is well under
    # the default scoped VMEM limit at these shapes, so no vmem_limit override.
    out2d = pl.pallas_call(
        kernel,
        out_shape=jax.ShapeDtypeStruct((n * h, wcout), x_nchw.dtype),
        in_specs=[pl.BlockSpec(memory_space=pltpu.MemorySpace.VMEM)] * 7,
        out_specs=pl.BlockSpec(memory_space=pltpu.MemorySpace.VMEM),
    )(x2, bw1, g1t, b1t, bw2, g2t, b2t)

    # lane-dense (N*H, W*Cout) -> NCHW
    return jnp.transpose(out2d.reshape(n, h, w, cout), (0, 3, 1, 2))


def ref_double_conv(x_nchw, w1, g1, b1, w2, g2, b2):
    """Pure-JAX reference (same semantics) for a correctness check."""
    x = jnp.transpose(x_nchw, (0, 2, 3, 1))

    def conv(y, wgt):
        return jax.lax.conv_general_dilated(
            y, wgt, window_strides=(1, 1), padding="SAME",
            dimension_numbers=("NHWC", "HWIO", "NHWC"))

    def bn_relu(y, g, b):
        mean = y.mean(axis=(0, 1, 2), keepdims=True)
        var = ((y - mean) ** 2).mean(axis=(0, 1, 2), keepdims=True)
        y = (y - mean) / jnp.sqrt(var + EPS) * g + b
        return jnp.maximum(y, 0.0)

    hh = bn_relu(conv(x, w1), g1, b1)
    o = bn_relu(conv(hh, w2), g2, b2)
    return jnp.transpose(o, (0, 3, 1, 2))


if __name__ == "__main__":
    # small shapes implied by the module: batch=2, in_channels=4,
    # out_channels=8, spatial 16x16  (W * Cout = 128 = TPU lane width)
    N, Cin, Cout, H, W = 2, 4, 8, 16, 16

    key = jax.random.PRNGKey(0)
    kx, kw1, kw2 = jax.random.split(key, 3)

    x = jax.random.normal(kx, (N, Cin, H, W), dtype=jnp.float32)
    # Conv2d has bias=False; BN defaults: gamma=1, beta=0
    w1 = jax.random.normal(kw1, (3, 3, Cin, Cout), dtype=jnp.float32) * 0.1
    w2 = jax.random.normal(kw2, (3, 3, Cout, Cout), dtype=jnp.float32) * 0.1
    g1 = jnp.ones((Cout,), jnp.float32)
    b1 = jnp.zeros((Cout,), jnp.float32)
    g2 = jnp.ones((Cout,), jnp.float32)
    b2 = jnp.zeros((Cout,), jnp.float32)

    out = double_conv(x, w1, g1, b1, w2, g2, b2)   # f32 path: exact parity
    out = jax.block_until_ready(out)

    ref = jax.block_until_ready(ref_double_conv(x, w1, g1, b1, w2, g2, b2))
    assert out.shape == (N, Cout, H, W)
    assert jnp.allclose(out, ref, rtol=2e-3, atol=2e-3), "mismatch vs JAX ref"

    print("KERNEL_OK")
</pallas_src>

<mosaic_0001>
module attributes {stable_mosaic.version = 11 : i64} {
  func.func @_double_conv_kernel(%arg0: memref<2x16x64xf32, #tpu.memory_space<vmem>>, %arg1: memref<192x128xf32, #tpu.memory_space<vmem>>, %arg2: memref<1x128xf32, #tpu.memory_space<vmem>>, %arg3: memref<1x128xf32, #tpu.memory_space<vmem>>, %arg4: memref<384x128xf32, #tpu.memory_space<vmem>>, %arg5: memref<1x128xf32, #tpu.memory_space<vmem>>, %arg6: memref<1x128xf32, #tpu.memory_space<vmem>>, %arg7: memref<32x128xf32, #tpu.memory_space<vmem>>) attributes {dimension_semantics = [], scalar_prefetch = 0 : i64, scratch_operands = 0 : i64, tpu.core_type = #tpu.core_type<tc>} {
    %0 = tpu.iota {dimensions = array<i32: 0>} : vector<128x128xi32>
    %1 = tpu.iota {dimensions = array<i32: 1>} : vector<128x128xi32>
    %c8_i32 = arith.constant 8 : i32
    %c0_i32 = arith.constant 0 : i32
    %2 = arith.cmpi eq, %c8_i32, %c0_i32 : i32
    %c1_i32 = arith.constant 1 : i32
    %3 = arith.select %2, %c1_i32, %c8_i32 : i32
    %4 = vector.broadcast %3 : i32 to vector<128x128xi32>
    %5 = arith.remsi %0, %4 : vector<128x128xi32>
    %c0_i32_0 = arith.constant 0 : i32
    %6 = vector.broadcast %c0_i32_0 : i32 to vector<128x128xi32>
    %7 = arith.cmpi ne, %5, %6 : vector<128x128xi32>
    %c0_i32_1 = arith.constant 0 : i32
    %8 = vector.broadcast %c0_i32_1 : i32 to vector<128x128xi32>
    %9 = arith.cmpi slt, %5, %8 : vector<128x128xi32>
    %c0_i32_2 = arith.constant 0 : i32
    %10 = arith.cmpi slt, %3, %c0_i32_2 : i32
    %11 = vector.broadcast %10 : i1 to vector<128x128xi1>
    %12 = vector.broadcast %11 : vector<128x128xi1> to vector<128x128xi1>
    %13 = arith.xori %9, %12 : vector<128x128xi1>
    %14 = arith.andi %13, %7 : vector<128x128xi1>
    %15 = vector.broadcast %3 : i32 to vector<128x128xi32>
    %16 = arith.addi %5, %15 : vector<128x128xi32>
    %17 = arith.select %14, %16, %5 : vector<128x128xi1>, vector<128x128xi32>
    %c8_i32_3 = arith.constant 8 : i32
    %c0_i32_4 = arith.constant 0 : i32
    %18 = arith.cmpi eq, %c8_i32_3, %c0_i32_4 : i32
    %c1_i32_5 = arith.constant 1 : i32
    %19 = arith.select %18, %c1_i32_5, %c8_i32_3 : i32
    %20 = vector.broadcast %19 : i32 to vector<128x128xi32>
    %21 = arith.remsi %1, %20 : vector<128x128xi32>
    %c0_i32_6 = arith.constant 0 : i32
    %22 = vector.broadcast %c0_i32_6 : i32 to vector<128x128xi32>
    %23 = arith.cmpi ne, %21, %22 : vector<128x128xi32>
    %c0_i32_7 = arith.constant 0 : i32
    %24 = vector.broadcast %c0_i32_7 : i32 to vector<128x128xi32>
    %25 = arith.cmpi slt, %21, %24 : vector<128x128xi32>
    %c0_i32_8 = arith.constant 0 : i32
    %26 = arith.cmpi slt, %19, %c0_i32_8 : i32
    %27 = vector.broadcast %26 : i1 to vector<128x128xi1>
    %28 = vector.broadcast %27 : vector<128x128xi1> to vector<128x128xi1>
    %29 = arith.xori %25, %28 : vector<128x128xi1>
    %30 = arith.andi %29, %23 : vector<128x128xi1>
    %31 = vector.broadcast %19 : i32 to vector<128x128xi32>
    %32 = arith.addi %21, %31 : vector<128x128xi32>
    %33 = arith.select %30, %32, %21 : vector<128x128xi1>, vector<128x128xi32>
    %34 = arith.cmpi eq, %17, %33 : vector<128x128xi32>
    %35 = arith.extui %34 : vector<128x128xi1> to vector<128x128xi32>
    %36 = arith.sitofp %35 : vector<128x128xi32> to vector<128x128xf32>
    %c0 = arith.constant 0 : index
    %c0_9 = arith.constant 0 : index
    %c0_10 = arith.constant 0 : index
    %37 = vector.load %arg0[%c0, %c0_9, %c0_10] : memref<2x16x64xf32, #tpu.memory_space<vmem>>, vector<2x16x64xf32>
    %cst = arith.constant 0.000000e+00 : f32
    %38 = vector.broadcast %cst : f32 to vector<2x1x64xf32>
    %39 = vector.extract_strided_slice %37 {offsets = [0, 0, 0], sizes = [2, 15, 64], strides = [1, 1, 1]} : vector<2x16x64xf32> to vector<2x15x64xf32>
    %40 = tpu.concatenate %38, %39 in 1 : vector<2x1x64xf32>, vector<2x15x64xf32> -> vector<2x16x64xf32>
    %41 = vector.extract_strided_slice %37 {offsets = [0, 1, 0], sizes = [2, 15, 64], strides = [1, 1, 1]} : vector<2x16x64xf32> to vector<2x15x64xf32>
    %42 = tpu.concatenate %41, %38 in 1 : vector<2x15x64xf32>, vector<2x1x64xf32> -> vector<2x16x64xf32>
    %43 = tpu.concatenate %40, %37, %42 in 2 : vector<2x16x64xf32>, vector<2x16x64xf32>, vector<2x16x64xf32> -> vector<2x16x192xf32>
    %44 = vector.shape_cast %43 : vector<2x16x192xf32> to vector<32x192xf32>
    %c0_11 = arith.constant 0 : index
    %c0_12 = arith.constant 0 : index
    %45 = vector.load %arg1[%c0_11, %c0_12] : memref<192x128xf32, #tpu.memory_space<vmem>>, vector<192x128xf32>
    %cst_13 = arith.constant dense<0.000000e+00> : vector<32x128xf32>
    %46 = tpu.matmul %44, %45, %cst_13 {dimension_numbers = #tpu.dot_dimension_numbers<[1], [0], [0], [1], [0, 0, 1, 1], [], []>} : vector<32x192xf32>, vector<192x128xf32>, vector<32x128xf32> -> vector<32x128xf32>
    %cst_14 = arith.constant dense<0.000000e+00> : vector<128xf32>
    %47 = vector.multi_reduction <add>, %46, %cst_14 [0] : vector<32x128xf32> to vector<128xf32>
    %48 = vector.shape_cast %47 : vector<128xf32> to vector<1x128xf32>
    %cst_15 = arith.constant dense<0.000000e+00> : vector<1x128xf32>
    %49 = tpu.matmul %48, %36, %cst_15 {dimension_numbers = #tpu.dot_dimension_numbers<[1], [0], [0], [1], [0, 0, 1, 1], [], []>} : vector<1x128xf32>, vector<128x128xf32>, vector<1x128xf32> -> vector<1x128xf32>
    %cst_16 = arith.constant 0.001953125 : f32
    %50 = vector.broadcast %cst_16 : f32 to vector<1x128xf32>
    %51 = arith.mulf %49, %50 : vector<1x128xf32>
    %52 = vector.broadcast %51 : vector<1x128xf32> to vector<32x128xf32>
    %53 = arith.subf %46, %52 : vector<32x128xf32>
    %54 = arith.mulf %53, %53 : vector<32x128xf32>
    %cst_17 = arith.constant dense<0.000000e+00> : vector<128xf32>
    %55 = vector.multi_reduction <add>, %54, %cst_17 [0] : vector<32x128xf32> to vector<128xf32>
    %56 = vector.shape_cast %55 : vector<128xf32> to vector<1x128xf32>
    %cst_18 = arith.constant dense<0.000000e+00> : vector<1x128xf32>
    %57 = tpu.matmul %56, %36, %cst_18 {dimension_numbers = #tpu.dot_dimension_numbers<[1], [0], [0], [1], [0, 0, 1, 1], [], []>} : vector<1x128xf32>, vector<128x128xf32>, vector<1x128xf32> -> vector<1x128xf32>
    %cst_19 = arith.constant 0.001953125 : f32
    %58 = vector.broadcast %cst_19 : f32 to vector<1x128xf32>
    %59 = arith.mulf %57, %58 : vector<1x128xf32>
    %cst_20 = arith.constant 9.99999974E-6 : f32
    %60 = vector.broadcast %cst_20 : f32 to vector<1x128xf32>
    %61 = arith.addf %59, %60 : vector<1x128xf32>
    %62 = math.rsqrt %61 : vector<1x128xf32>
    %63 = vector.broadcast %62 : vector<1x128xf32> to vector<32x128xf32>
    %64 = arith.mulf %53, %63 : vector<32x128xf32>
    %c0_21 = arith.constant 0 : index
    %c0_22 = arith.constant 0 : index
    %65 = vector.load %arg2[%c0_21, %c0_22] : memref<1x128xf32, #tpu.memory_space<vmem>>, vector<1x128xf32>
    %66 = vector.broadcast %65 : vector<1x128xf32> to vector<32x128xf32>
    %67 = arith.mulf %64, %66 : vector<32x128xf32>
    %c0_23 = arith.constant 0 : index
    %c0_24 = arith.constant 0 : index
    %68 = vector.load %arg3[%c0_23, %c0_24] : memref<1x128xf32, #tpu.memory_space<vmem>>, vector<1x128xf32>
    %69 = vector.broadcast %68 : vector<1x128xf32> to vector<32x128xf32>
    %70 = arith.addf %67, %69 : vector<32x128xf32>
    %cst_25 = arith.constant 0.000000e+00 : f32
    %71 = vector.broadcast %cst_25 : f32 to vector<32x128xf32>
    %72 = arith.maximumf %70, %71 : vector<32x128xf32>
    %73 = vector.shape_cast %72 : vector<32x128xf32> to vector<2x16x128xf32>
    %cst_26 = arith.constant 0.000000e+00 : f32
    %74 = vector.broadcast %cst_26 : f32 to vector<2x1x128xf32>
    %75 = vector.extract_strided_slice %73 {offsets = [0, 0, 0], sizes = [2, 15, 128], strides = [1, 1, 1]} : vector<2x16x128xf32> to vector<2x15x128xf32>
    %76 = tpu.concatenate %74, %75 in 1 : vector<2x1x128xf32>, vector<2x15x128xf32> -> vector<2x16x128xf32>
    %77 = vector.extract_strided_slice %73 {offsets = [0, 1, 0], sizes = [2, 15, 128], strides = [1, 1, 1]} : vector<2x16x128xf32> to vector<2x15x128xf32>
    %78 = tpu.concatenate %77, %74 in 1 : vector<2x15x128xf32>, vector<2x1x128xf32> -> vector<2x16x128xf32>
    %79 = tpu.concatenate %76, %73, %78 in 2 : vector<2x16x128xf32>, vector<2x16x128xf32>, vector<2x16x128xf32> -> vector<2x16x384xf32>
    %80 = vector.shape_cast %79 : vector<2x16x384xf32> to vector<32x384xf32>
    %c0_27 = arith.constant 0 : index
    %c0_28 = arith.constant 0 : index
    %81 = vector.load %arg4[%c0_27, %c0_28] : memref<384x128xf32, #tpu.memory_space<vmem>>, vector<384x128xf32>
    %cst_29 = arith.constant dense<0.000000e+00> : vector<32x128xf32>
    %82 = tpu.matmul %80, %81, %cst_29 {dimension_numbers = #tpu.dot_dimension_numbers<[1], [0], [0], [1], [0, 0, 1, 1], [], []>} : vector<32x384xf32>, vector<384x128xf32>, vector<32x128xf32> -> vector<32x128xf32>
    %cst_30 = arith.constant dense<0.000000e+00> : vector<128xf32>
    %83 = vector.multi_reduction <add>, %82, %cst_30 [0] : vector<32x128xf32> to vector<128xf32>
    %84 = vector.shape_cast %83 : vector<128xf32> to vector<1x128xf32>
    %cst_31 = arith.constant dense<0.000000e+00> : vector<1x128xf32>
    %85 = tpu.matmul %84, %36, %cst_31 {dimension_numbers = #tpu.dot_dimension_numbers<[1], [0], [0], [1], [0, 0, 1, 1], [], []>} : vector<1x128xf32>, vector<128x128xf32>, vector<1x128xf32> -> vector<1x128xf32>
    %cst_32 = arith.constant 0.001953125 : f32
    %86 = vector.broadcast %cst_32 : f32 to vector<1x128xf32>
    %87 = arith.mulf %85, %86 : vector<1x128xf32>
    %88 = vector.broadcast %87 : vector<1x128xf32> to vector<32x128xf32>
    %89 = arith.subf %82, %88 : vector<32x128xf32>
    %90 = arith.mulf %89, %89 : vector<32x128xf32>
    %cst_33 = arith.constant dense<0.000000e+00> : vector<128xf32>
    %91 = vector.multi_reduction <add>, %90, %cst_33 [0] : vector<32x128xf32> to vector<128xf32>
    %92 = vector.shape_cast %91 : vector<128xf32> to vector<1x128xf32>
    %cst_34 = arith.constant dense<0.000000e+00> : vector<1x128xf32>
    %93 = tpu.matmul %92, %36, %cst_34 {dimension_numbers = #tpu.dot_dimension_numbers<[1], [0], [0], [1], [0, 0, 1, 1], [], []>} : vector<1x128xf32>, vector<128x128xf32>, vector<1x128xf32> -> vector<1x128xf32>
    %cst_35 = arith.constant 0.001953125 : f32
    %94 = vector.broadcast %cst_35 : f32 to vector<1x128xf32>
    %95 = arith.mulf %93, %94 : vector<1x128xf32>
    %cst_36 = arith.constant 9.99999974E-6 : f32
    %96 = vector.broadcast %cst_36 : f32 to vector<1x128xf32>
    %97 = arith.addf %95, %96 : vector<1x128xf32>
    %98 = math.rsqrt %97 : vector<1x128xf32>
    %99 = vector.broadcast %98 : vector<1x128xf32> to vector<32x128xf32>
    %100 = arith.mulf %89, %99 : vector<32x128xf32>
    %c0_37 = arith.constant 0 : index
    %c0_38 = arith.constant 0 : index
    %101 = vector.load %arg5[%c0_37, %c0_38] : memref<1x128xf32, #tpu.memory_space<vmem>>, vector<1x128xf32>
    %102 = vector.broadcast %101 : vector<1x128xf32> to vector<32x128xf32>
    %103 = arith.mulf %100, %102 : vector<32x128xf32>
    %c0_39 = arith.constant 0 : index
    %c0_40 = arith.constant 0 : index
    %104 = vector.load %arg6[%c0_39, %c0_40] : memref<1x128xf32, #tpu.memory_space<vmem>>, vector<1x128xf32>
    %105 = vector.broadcast %104 : vector<1x128xf32> to vector<32x128xf32>
    %106 = arith.addf %103, %105 : vector<32x128xf32>
    %cst_41 = arith.constant 0.000000e+00 : f32
    %107 = vector.broadcast %cst_41 : f32 to vector<32x128xf32>
    %108 = arith.maximumf %106, %107 : vector<32x128xf32>
    %c0_42 = arith.constant 0 : index
    %c0_43 = arith.constant 0 : index
    %109 = vector.load %arg7[%c0_42, %c0_43] : memref<32x128xf32, #tpu.memory_space<vmem>>, vector<32x128xf32>
    tpu.vector_store %arg7[%c0_42, %c0_43], %108 {strides = array<i32>} : memref<32x128xf32, #tpu.memory_space<vmem>>, vector<32x128xf32>,
    return
  }
}

</mosaic_0001>

<llo_original>
// kernel: tpu_custom_call.1
$region0: #{tpu_custom_call.1}
  #allocation0 [shape = 'u32[]', space=smem, size = 0x4, offset = 0x4, fixed_abs, tag = 'smem constant byte address 0x4 - core index']
  #allocation1 [shape = 'u32[144,128]{1,0:T(1,128)}', space=vmem, size = 0x12000, scoped, tag = 'internal scratch']
  %s0 = inlined_call_operand.hbm [shape: f32[2,16,64], index: 0, kind: input, shape index: {}]
  %s1 = inlined_call_operand.hbm [shape: f32[192,128], index: 1, kind: input, shape index: {}]
  %s2 = inlined_call_operand.vmem [shape: f32[1,128], index: 2, kind: input, shape index: {}]
  %s3 = inlined_call_operand.vmem [shape: f32[1,128], index: 3, kind: input, shape index: {}]
  %s4 = inlined_call_operand.hbm [shape: f32[384,128], index: 4, kind: input, shape index: {}]
  %s5 = inlined_call_operand.vmem [shape: f32[1,128], index: 5, kind: input, shape index: {}]
  %s6 = inlined_call_operand.vmem [shape: f32[1,128], index: 6, kind: input, shape index: {}]
  %s7 = inlined_call_operand.hbm [shape: f32[32,128], index: 7, kind: output, shape index: {}]
  %s8 = sld [smem:[#allocation0]]
  $region50: #{tpu_custom_call.1} parent=0
    _
  %s10 = ssub.s32 1, %s8
  %s11 = scalar_select 0, %s10, %s8
  $region1: #{tpu_custom_call.1} parent=0
    #allocation2 [shape = 'u8[16384]{0}', space=vmem, size = 0x4000, scoped, tag = 'input window, operand 0, single buffered']
    #allocation3 [shape = 's32[1]{0}', space=sflag, size = 0x4, scoped, tag = 'scoped memory for tpu_custom_call.1']
    #allocation4 [shape = 's32[1]{0}', space=sflag, size = 0x4, scoped, tag = 'scoped memory for tpu_custom_call.1']
    #allocation5 [shape = 'u8[98304]{0}', space=vmem, size = 0x18000, scoped, tag = 'input window, operand 1, single buffered']
    #allocation6 [shape = 's32[1]{0}', space=sflag, size = 0x4, scoped, tag = 'scoped memory for tpu_custom_call.1']
    #allocation7 [shape = 'u8[196608]{0}', space=vmem, size = 0x30000, scoped, tag = 'input window, operand 4, single buffered']
    #allocation8 [shape = 'u8[16384]{0}', space=vmem, size = 0x4000, scoped, tag = 'output window, operand 0, single buffered']
    %12 = vsyncpa [#allocation3], 0
    %13 = vsyncpa [#allocation6], 0
    %14 = vsyncpa [#allocation4], 0
    // Predicated region
    $region2: #{tpu_custom_call.1} parent=1 // pred_check
      _
    $region3: #{tpu_custom_call.1} parent=1 // pred_check_branch
      %16 = sbr.rel (0) target = $region5
    $region4: #{tpu_custom_call.1} parent=1 // pred_region
      %s18 = ssub.s32 512, 512
      %19 = vsyncadd [#allocation3], %s18
      %s20 = sshll.u32 [#allocation2], 4
      %s21 = int_to_ptr.vmem [resolvable:$true] %s20
      %26 = dma.hbm_to_vmem [thread:$0]  %s0, 512, %s21, [#allocation3], 128, 128, 8
    $region5: #{tpu_custom_call.1} parent=1 // pred_fallthru
      _
    // Predicated region
    $region6: #{tpu_custom_call.1} parent=1 // pred_check
      _
    $region7: #{tpu_custom_call.1} parent=1 // pred_check_branch
      %28 = sbr.rel (0) target = $region9
    $region8: #{tpu_custom_call.1} parent=1 // pred_region
      %s30 = ssub.s32 3072, 3072
      %31 = vsyncadd [#allocation6], %s30
      %s32 = sshll.u32 [#allocation5], 4
      %s33 = int_to_ptr.vmem [resolvable:$true] %s32
      %38 = dma.hbm_to_vmem [thread:$0]  %s1, 3072, %s33, [#allocation6], 128, 128, 8
    $region9: #{tpu_custom_call.1} parent=1 // pred_fallthru
      _
    // Predicated region
    $region10: #{tpu_custom_call.1} parent=1 // pred_check
      _
    $region11: #{tpu_custom_call.1} parent=1 // pred_check_branch
      %40 = sbr.rel (0) target = $region13
    $region12: #{tpu_custom_call.1} parent=1 // pred_region
      _
    $region13: #{tpu_custom_call.1} parent=1 // pred_fallthru
      _
    // Predicated region
    $region14: #{tpu_custom_call.1} parent=1 // pred_check
      _
    $region15: #{tpu_custom_call.1} parent=1 // pred_check_branch
      %42 = sbr.rel (0) target = $region17
    $region16: #{tpu_custom_call.1} parent=1 // pred_region
      _
    $region17: #{tpu_custom_call.1} parent=1 // pred_fallthru
      _
    // Predicated region
    $region18: #{tpu_custom_call.1} parent=1 // pred_check
      _
    $region19: #{tpu_custom_call.1} parent=1 // pred_check_branch
      %44 = sbr.rel (0) target = $region21
    $region20: #{tpu_custom_call.1} parent=1 // pred_region
      %s46 = ssub.s32 6144, 6144
      %47 = vsyncadd [#allocation6], %s46
      %s48 = sshll.u32 [#allocation7], 4
      %s49 = int_to_ptr.vmem [resolvable:$true] %s48
      %54 = dma.hbm_to_vmem [thread:$0]  %s4, 6144, %s49, [#allocation6], 128, 128, 8
    $region21: #{tpu_custom_call.1} parent=1 // pred_fallthru
      _
    // Predicated region
    $region22: #{tpu_custom_call.1} parent=1 // pred_check
      _
    $region23: #{tpu_custom_call.1} parent=1 // pred_check_branch
      %56 = sbr.rel (0) target = $region25
    $region24: #{tpu_custom_call.1} parent=1 // pred_region
      _
    $region25: #{tpu_custom_call.1} parent=1 // pred_fallthru
      _
    // Predicated region
    $region26: #{tpu_custom_call.1} parent=1 // pred_check
      _
    $region27: #{tpu_custom_call.1} parent=1 // pred_check_branch
      %58 = sbr.rel (0) target = $region29
    $region28: #{tpu_custom_call.1} parent=1 // pred_region
      _
    $region29: #{tpu_custom_call.1} parent=1 // pred_fallthru
      _
    // Predicated region
    $region30: #{tpu_custom_call.1} parent=1 // pred_check
      _
    $region31: #{tpu_custom_call.1} parent=1 // pred_check_branch
      %60 = sbr.rel (0) target = $region33
    $region32: #{tpu_custom_call.1} parent=1 // pred_region
      %61 = dma.done [#allocation3], 512
    $region33: #{tpu_custom_call.1} parent=1 // pred_fallthru
      _
    // Predicated region
    $region34: #{tpu_custom_call.1} parent=1 // pred_check
      _
    $region35: #{tpu_custom_call.1} parent=1 // pred_check_branch
      %63 = sbr.rel (0) target = $region37
    $region36: #{tpu_custom_call.1} parent=1 // pred_region
      %64 = dma.done [#allocation6], 3072
    $region37: #{tpu_custom_call.1} parent=1 // pred_fallthru
      _
    // Predicated region
    $region38: #{tpu_custom_call.1} parent=1 // pred_check
      _
    $region39: #{tpu_custom_call.1} parent=1 // pred_check_branch
      %66 = sbr.rel (0) target = $region41
    $region40: #{tpu_custom_call.1} parent=1 // pred_region
      %67 = dma.done [#allocation6], 6144
    $region41: #{tpu_custom_call.1} parent=1 // pred_fallthru
      _
    %v68 = vlaneseq
    %v69 = vshrl.u32 %v68, 7
    %v70 = vadd.s32 %v69, 8
    %v71 = vadd.s32 %v69, 16
    %v72 = vadd.s32 %v69, 24
    %v73 = vadd.s32 %v69, 32
    %v74 = vadd.s32 %v69, 40
    %v75 = vadd.s32 %v69, 48
    %v76 = vadd.s32 %v69, 56
    %v77 = vadd.s32 %v69, 64
    %v78 = vadd.s32 %v69, 72
    %v79 = vadd.s32 %v69, 80
    %v80 = vadd.s32 %v69, 88
    %v81 = vadd.s32 %v69, 96
    %v82 = vadd.s32 %v69, 104
    %v83 = vadd.s32 %v69, 112
    %v84 = vadd.s32 %v69, 120
    %v85 = vlaneseq
    %v86 = vand.u32 %v85, 127
    %vm87 = vcmp.lt.s32.totalorder %v69, 0
    %v88 = vsub.s32 0, %v69
    %v89 = vsel %vm87, %v88, %v69
    %v90 = vshrl.u32 %v89, 3
    %v91 = vand.u32 %v89, 7
    %v92 = vsub.s32 0, %v91
    %v93 = vsel %vm87, %v92, %v91
    %vm94 = vcmp.lt.s32.totalorder %v70, 0
    %v95 = vsub.s32 0, %v70
    %v96 = vsel %vm94, %v95, %v70
    %v97 = vshrl.u32 %v96, 3
    %v98 = vand.u32 %v96, 7
    %v99 = vsub.s32 0, %v98
    %v100 = vsel %vm94, %v99, %v98
    %vm101 = vcmp.lt.s32.totalorder %v71, 0
    %v102 = vsub.s32 0, %v71
    %v103 = vsel %vm101, %v102, %v71
    %v104 = vshrl.u32 %v103, 3
    %v105 = vand.u32 %v103, 7
    %v106 = vsub.s32 0, %v105
    %v107 = vsel %vm101, %v106, %v105
    %vm108 = vcmp.lt.s32.totalorder %v72, 0
    %v109 = vsub.s32 0, %v72
    %v110 = vsel %vm108, %v109, %v72
    %v111 = vshrl.u32 %v110, 3
    %v112 = vand.u32 %v110, 7
    %v113 = vsub.s32 0, %v112
    %v114 = vsel %vm108, %v113, %v112
    %vm115 = vcmp.lt.s32.totalorder %v73, 0
    %v116 = vsub.s32 0, %v73
    %v117 = vsel %vm115, %v116, %v73
    %v118 = vshrl.u32 %v117, 3
    %v119 = vand.u32 %v117, 7
    %v120 = vsub.s32 0, %v119
    %v121 = vsel %vm115, %v120, %v119
    %vm122 = vcmp.lt.s32.totalorder %v74, 0
    %v123 = vsub.s32 0, %v74
    %v124 = vsel %vm122, %v123, %v74
    %v125 = vshrl.u32 %v124, 3
    %v126 = vand.u32 %v124, 7
    %v127 = vsub.s32 0, %v126
    %v128 = vsel %vm122, %v127, %v126
    %vm129 = vcmp.lt.s32.totalorder %v75, 0
    %v130 = vsub.s32 0, %v75
    %v131 = vsel %vm129, %v130, %v75
    %v132 = vshrl.u32 %v131, 3
    %v133 = vand.u32 %v131, 7
    %v134 = vsub.s32 0, %v133
    %v135 = vsel %vm129, %v134, %v133
    %vm136 = vcmp.lt.s32.totalorder %v76, 0
    %v137 = vsub.s32 0, %v76
    %v138 = vsel %vm136, %v137, %v76
    %v139 = vshrl.u32 %v138, 3
    %v140 = vand.u32 %v138, 7
    %v141 = vsub.s32 0, %v140
    %v142 = vsel %vm136, %v141, %v140
    %vm143 = vcmp.lt.s32.totalorder %v77, 0
    %v144 = vsub.s32 0, %v77
    %v145 = vsel %vm143, %v144, %v77
    %v146 = vshrl.u32 %v145, 3
    %v147 = vand.u32 %v145, 7
    %v148 = vsub.s32 0, %v147
    %v149 = vsel %vm143, %v148, %v147
    %vm150 = vcmp.lt.s32.totalorder %v78, 0
    %v151 = vsub.s32 0, %v78
    %v152 = vsel %vm150, %v151, %v78
    %v153 = vshrl.u32 %v152, 3
    %v154 = vand.u32 %v152, 7
    %v155 = vsub.s32 0, %v154
    %v156 = vsel %vm150, %v155, %v154
    %vm157 = vcmp.lt.s32.totalorder %v79, 0
    %v158 = vsub.s32 0, %v79
    %v159 = vsel %vm157, %v158, %v79
    %v160 = vshrl.u32 %v159, 3
    %v161 = vand.u32 %v159, 7
    %v162 = vsub.s32 0, %v161
    %v163 = vsel %vm157, %v162, %v161
    %vm164 = vcmp.lt.s32.totalorder %v80, 0
    %v165 = vsub.s32 0, %v80
    %v166 = vsel %vm164, %v165, %v80
    %v167 = vshrl.u32 %v166, 3
    %v168 = vand.u32 %v166, 7
    %v169 = vsub.s32 0, %v168
    %v170 = vsel %vm164, %v169, %v168
    %vm171 = vcmp.lt.s32.totalorder %v81, 0
    %v172 = vsub.s32 0, %v81
    %v173 = vsel %vm171, %v172, %v81
    %v174 = vshrl.u32 %v173, 3
    %v175 = vand.u32 %v173, 7
    %v176 = vsub.s32 0, %v175
    %v177 = vsel %vm171, %v176, %v175
    %vm178 = vcmp.lt.s32.totalorder %v82, 0
    %v179 = vsub.s32 0, %v82
    %v180 = vsel %vm178, %v179, %v82
    %v181 = vshrl.u32 %v180, 3
    %v182 = vand.u32 %v180, 7
    %v183 = vsub.s32 0, %v182
    %v184 = vsel %vm178, %v183, %v182
    %vm185 = vcmp.lt.s32.totalorder %v83, 0
    %v186 = vsub.s32 0, %v83
    %v187 = vsel %vm185, %v186, %v83
    %v188 = vshrl.u32 %v187, 3
    %v189 = vand.u32 %v187, 7
    %v190 = vsub.s32 0, %v189
    %v191 = vsel %vm185, %v190, %v189
    %vm192 = vcmp.lt.s32.totalorder %v84, 0
    %v193 = vsub.s32 0, %v84
    %v194 = vsel %vm192, %v193, %v84
    %v195 = vshrl.u32 %v194, 3
    %v196 = vand.u32 %v194, 7
    %v197 = vsub.s32 0, %v196
    %v198 = vsel %vm192, %v197, %v196
    %vm199 = vcmp.ne.s32.totalorder %v93, 0
    %vm200 = vcmp.ne.s32.totalorder %v100, 0
    %vm201 = vcmp.ne.s32.totalorder %v107, 0
    %vm202 = vcmp.ne.s32.totalorder %v114, 0
    %vm203 = vcmp.ne.s32.totalorder %v121, 0
    %vm204 = vcmp.ne.s32.totalorder %v128, 0
    %vm205 = vcmp.ne.s32.totalorder %v135, 0
    %vm206 = vcmp.ne.s32.totalorder %v142, 0
    %vm207 = vcmp.ne.s32.totalorder %v149, 0
    %vm208 = vcmp.ne.s32.totalorder %v156, 0
    %vm209 = vcmp.ne.s32.totalorder %v163, 0
    %vm210 = vcmp.ne.s32.totalorder %v170, 0
    %vm211 = vcmp.ne.s32.totalorder %v177, 0
    %vm212 = vcmp.ne.s32.totalorder %v184, 0
    %vm213 = vcmp.ne.s32.totalorder %v191, 0
    %vm214 = vcmp.ne.s32.totalorder %v198, 0
    %vm215 = vcmp.lt.s32.totalorder %v93, 0
    %vm216 = vcmp.lt.s32.totalorder %v100, 0
    %vm217 = vcmp.lt.s32.totalorder %v107, 0
    %vm218 = vcmp.lt.s32.totalorder %v114, 0
    %vm219 = vcmp.lt.s32.totalorder %v121, 0
    %vm220 = vcmp.lt.s32.totalorder %v128, 0
    %vm221 = vcmp.lt.s32.totalorder %v135, 0
    %vm222 = vcmp.lt.s32.totalorder %v142, 0
    %vm223 = vcmp.lt.s32.totalorder %v149, 0
    %vm224 = vcmp.lt.s32.totalorder %v156, 0
    %vm225 = vcmp.lt.s32.totalorder %v163, 0
    %vm226 = vcmp.lt.s32.totalorder %v170, 0
    %vm227 = vcmp.lt.s32.totalorder %v177, 0
    %vm228 = vcmp.lt.s32.totalorder %v184, 0
    %vm229 = vcmp.lt.s32.totalorder %v191, 0
    %vm230 = vcmp.lt.s32.totalorder %v198, 0
    %vm231 = vmand %vm215, %vm199
    %vm232 = vmand %vm216, %vm200
    %vm233 = vmand %vm217, %vm201
    %vm234 = vmand %vm218, %vm202
    %vm235 = vmand %vm219, %vm203
    %vm236 = vmand %vm220, %vm204
    %vm237 = vmand %vm221, %vm205
    %vm238 = vmand %vm222, %vm206
    %vm239 = vmand %vm223, %vm207
    %vm240 = vmand %vm224, %vm208
    %vm241 = vmand %vm225, %vm209
    %vm242 = vmand %vm226, %vm210
    %vm243 = vmand %vm227, %vm211
    %vm244 = vmand %vm228, %vm212
    %vm245 = vmand %vm229, %vm213
    %vm246 = vmand %vm230, %vm214
    %v247 = vadd.s32 %v93, 8
    %v248 = vadd.s32 %v100, 8
    %v249 = vadd.s32 %v107, 8
    %v250 = vadd.s32 %v114, 8
    %v251 = vadd.s32 %v121, 8
    %v252 = vadd.s32 %v128, 8
    %v253 = vadd.s32 %v135, 8
    %v254 = vadd.s32 %v142, 8
    %v255 = vadd.s32 %v149, 8
    %v256 = vadd.s32 %v156, 8
    %v257 = vadd.s32 %v163, 8
    %v258 = vadd.s32 %v170, 8
    %v259 = vadd.s32 %v177, 8
    %v260 = vadd.s32 %v184, 8
    %v261 = vadd.s32 %v191, 8
    %v262 = vadd.s32 %v198, 8
    %v263 = vsel %vm231, %v247, %v93
    %v264 = vsel %vm232, %v248, %v100
    %v265 = vsel %vm233, %v249, %v107
    %v266 = vsel %vm234, %v250, %v114
    %v267 = vsel %vm235, %v251, %v121
    %v268 = vsel %vm236, %v252, %v128
    %v269 = vsel %vm237, %v253, %v135
    %v270 = vsel %vm238, %v254, %v142
    %v271 = vsel %vm239, %v255, %v149
    %v272 = vsel %vm240, %v256, %v156
    %v273 = vsel %vm241, %v257, %v163
    %v274 = vsel %vm242, %v258, %v170
    %v275 = vsel %vm243, %v259, %v177
    %v276 = vsel %vm244, %v260, %v184
    %v277 = vsel %vm245, %v261, %v191
    %v278 = vsel %vm246, %v262, %v198
    %vm279 = vcmp.lt.s32.totalorder %v86, 0
    %v280 = vsub.s32 0, %v86
    %v281 = vsel %vm279, %v280, %v86
    %v282 = vshrl.u32 %v281, 3
    %v283 = vand.u32 %v281, 7
    %v284 = vsub.s32 0, %v283
    %v285 = vsel %vm279, %v284, %v283
    %vm286 = vcmp.ne.s32.totalorder %v285, 0
    %vm287 = vcmp.lt.s32.totalorder %v285, 0
    %vm288 = vmand %vm287, %vm286
    %v289 = vadd.s32 %v285, 8
    %v290 = vsel %vm288, %v289, %v285
    %vm291 = vcmp.eq.s32.totalorder %v263, %v290
    %vm292 = vcmp.eq.s32.totalorder %v264, %v290
    %vm293 = vcmp.eq.s32.totalorder %v265, %v290
    %vm294 = vcmp.eq.s32.totalorder %v266, %v290
    %vm295 = vcmp.eq.s32.totalorder %v267, %v290
    %vm296 = vcmp.eq.s32.totalorder %v268, %v290
    %vm297 = vcmp.eq.s32.totalorder %v269, %v290
    %vm298 = vcmp.eq.s32.totalorder %v270, %v290
    %vm299 = vcmp.eq.s32.totalorder %v271, %v290
    %vm300 = vcmp.eq.s32.totalorder %v272, %v290
    %vm301 = vcmp.eq.s32.totalorder %v273, %v290
    %vm302 = vcmp.eq.s32.totalorder %v274, %v290
    %vm303 = vcmp.eq.s32.totalorder %v275, %v290
    %vm304 = vcmp.eq.s32.totalorder %v276, %v290
    %vm305 = vcmp.eq.s32.totalorder %v277, %v290
    %vm306 = vcmp.eq.s32.totalorder %v278, %v290
    %v307 = vsel %vm291, 1, 0
    %v308 = vsel %vm292, 1, 0
    %v309 = vsel %vm293, 1, 0
    %v310 = vsel %vm294, 1, 0
    %v311 = vsel %vm295, 1, 0
    %v312 = vsel %vm296, 1, 0
    %v313 = vsel %vm297, 1, 0
    %v314 = vsel %vm298, 1, 0
    %v315 = vsel %vm299, 1, 0
    %v316 = vsel %vm300, 1, 0
    %v317 = vsel %vm301, 1, 0
    %v318 = vsel %vm302, 1, 0
    %v319 = vsel %vm303, 1, 0
    %v320 = vsel %vm304, 1, 0
    %v321 = vsel %vm305, 1, 0
    %v322 = vsel %vm306, 1, 0
    %v323 = vcvt.s32.f32 %v307
    %v324 = vcvt.s32.f32 %v308
    %v325 = vcvt.s32.f32 %v309
    %v326 = vcvt.s32.f32 %v310
    %v327 = vcvt.s32.f32 %v311
    %v328 = vcvt.s32.f32 %v312
    %v329 = vcvt.s32.f32 %v313
    %v330 = vcvt.s32.f32 %v314
    %v331 = vcvt.s32.f32 %v315
    %v332 = vcvt.s32.f32 %v316
    %v333 = vcvt.s32.f32 %v317
    %v334 = vcvt.s32.f32 %v318
    %v335 = vcvt.s32.f32 %v319
    %v336 = vcvt.s32.f32 %v320
    %v337 = vcvt.s32.f32 %v321
    %v338 = vcvt.s32.f32 %v322
    %v339 = vld [vmem:[#allocation2] sm:$0xff]
    %v340 = vld [vmem:[#allocation2 + $0x8] sm:$0xff]
    %v341 = vld [vmem:[#allocation2 + $0x10] sm:$0xff]
    %v342 = vld [vmem:[#allocation2 + $0x18] sm:$0xff]
    %vm347 = vcmask 1040384
    %v348 = vrot.slane %v339, 7
    %v349 = vrot.slane %v340, 7
    %v350 = vsel %vm347, %v348, %v349
    %v351 = vrot.slane %v341, 7
    %v352 = vrot.slane %v342, 7
    %v353 = vsel %vm347, %v351, %v352
    %v358 = vsel %vm347, 0.0, %v348
    %v359 = vsel %vm347, 0.0, %v351
    %vm360 = vcmask 1046528
    %v361 = vrot.slane %v339, 1
    %v362 = vrot.slane %v340, 1
    %v363 = vsel %vm360, %v361, %v362
    %v364 = vrot.slane %v341, 1
    %v365 = vrot.slane %v342, 1
    %v366 = vsel %vm360, %v364, %v365
    %v369 = vsel %vm360, %v362, 0.0
    %v370 = vsel %vm360, %v365, 0.0
    %371 = vrot.lane.b32.xlu0 %v339, 64
    %v372 = vpop.permute.xlu0 %371
    %373 = vrot.lane.b32.xlu0 %v340, 64
    %v374 = vpop.permute.xlu0 %373
    %375 = vrot.lane.b32.xlu0 %v341, 64
    %v376 = vpop.permute.xlu0 %375
    %377 = vrot.lane.b32.xlu0 %v342, 64
    %v378 = vpop.permute.xlu0 %377
    %vm383 = vcmask 523264
    %v384 = vsel %vm383, %v358, %v372
    %v385 = vsel %vm383, %v350, %v374
    %v386 = vsel %vm383, %v359, %v376
    %v387 = vsel %vm383, %v353, %v378
    %v388 = vld [vmem:[#allocation5] sm:$0xff]
    %v389 = vld [vmem:[#allocation5 + $0x8] sm:$0xff]
    %v390 = vld [vmem:[#allocation5 + $0x10] sm:$0xff]
    %v391 = vld [vmem:[#allocation5 + $0x18] sm:$0xff]
    %v392 = vld [vmem:[#allocation5 + $0x20] sm:$0xff]
    %v393 = vld [vmem:[#allocation5 + $0x28] sm:$0xff]
    %v394 = vld [vmem:[#allocation5 + $0x30] sm:$0xff]
    %v395 = vld [vmem:[#allocation5 + $0x38] sm:$0xff]
    %v396 = vld [vmem:[#allocation5 + $0x40] sm:$0xff]
    %v397 = vld [vmem:[#allocation5 + $0x48] sm:$0xff]
    %v398 = vld [vmem:[#allocation5 + $0x50] sm:$0xff]
    %v399 = vld [vmem:[#allocation5 + $0x58] sm:$0xff]
    %v400 = vld [vmem:[#allocation5 + $0x60] sm:$0xff]
    %v401 = vld [vmem:[#allocation5 + $0x68] sm:$0xff]
    %v402 = vld [vmem:[#allocation5 + $0x70] sm:$0xff]
    %v403 = vld [vmem:[#allocation5 + $0x78] sm:$0xff]
    %v404 = vld [vmem:[#allocation5 + $0x80] sm:$0xff]
    %v405 = vld [vmem:[#allocation5 + $0x88] sm:$0xff]
    %v406 = vld [vmem:[#allocation5 + $0x90] sm:$0xff]
    %v407 = vld [vmem:[#allocation5 + $0x98] sm:$0xff]
    %v408 = vld [vmem:[#allocation5 + $0xa0] sm:$0xff]
    %v409 = vld [vmem:[#allocation5 + $0xa8] sm:$0xff]
    %v410 = vld [vmem:[#allocation5 + $0xb0] sm:$0xff]
    %v411 = vld [vmem:[#allocation5 + $0xb8] sm:$0xff]
    %v412 = vsel %vm383, %v363, 0
    %v415 = vsel %vm383, %v369, 0
    %v417 = vsel %vm383, %v366, 0
    %v420 = vsel %vm383, %v370, 0
    %422 = vmatprep.subr.mxu0 0.0
    %423 = vmatpush1.msra.mxu0 %v388
    %424 = vmatprep.subr.mxu0 0.0
    %425 = vmatpush1.msra.mxu0 %v389
    %426 = vmatprep.subr.mxu0 0.0
    %427 = vmatpush1.msra.mxu0 %v390
    %428 = vmatprep.subr.mxu0 0.0
    %429 = vmatpush1.msra.mxu0 %v391
    %430 = vmatprep.subr.mxu0 0.0
    %431 = vmatpush1.msra.mxu0 %v392
    %432 = vmatprep.subr.mxu0 0.0
    %433 = vmatpush1.msra.mxu0 %v393
    %434 = vmatprep.subr.mxu0 0.0
    %435 = vmatpush1.msra.mxu0 %v394
    %436 = vmatprep.subr.mxu0 0.0
    %437 = vmatpush1.msra.mxu0 %v395
    %438 = vmatprep.subr.mxu0 0.0
    %439 = vmatpush1.msra.mxu0 %v396
    %440 = vmatprep.subr.mxu0 0.0
    %441 = vmatpush1.msra.mxu0 %v397
    %442 = vmatprep.subr.mxu0 0.0
    %443 = vmatpush1.msra.mxu0 %v398
    %444 = vmatprep.subr.mxu0 0.0
    %445 = vmatpush1.msra.mxu0 %v399
    %446 = vmatprep.subr.mxu0 0.0
    %447 = vmatpush1.msra.mxu0 %v400
    %448 = vmatprep.subr.mxu0 0.0
    %449 = vmatpush1.msra.mxu0 %v401
    %450 = vmatprep.subr.mxu0 0.0
    %451 = vmatpush1.msra.mxu0 %v402
    %452 = vmatprep.subr.mxu0 0.0
    %453 = vmatpush1.msra.mxu0 %v403
    %454 = vmatprep.subr.mxu0 0.0
    %455 = vmatpush1.msra.mxu0 %v404
    %456 = vmatprep.subr.mxu0 0.0
    %457 = vmatpush1.msra.mxu0 %v405
    %458 = vmatprep.subr.mxu0 0.0
    %459 = vmatpush1.msra.mxu0 %v406
    %460 = vmatprep.subr.mxu0 0.0
    %461 = vmatpush1.msra.mxu0 %v407
    %462 = vmatprep.subr.mxu0 0.0
    %463 = vmatpush1.msra.mxu0 %v408
    %464 = vmatprep.subr.mxu0 0.0
    %465 = vmatpush1.msra.mxu0 %v409
    %466 = vmatprep.subr.mxu0 0.0
    %467 = vmatpush1.msra.mxu0 %v410
    %468 = vmatprep.subr.mxu0 0.0
    %469 = vmatpush1.msra.mxu0 %v411
    %470 = vmatprep.subr.mxu0 0.0
    %471 = vmatpush1.msra.mxu0 0.0
    %472 = vmatprep.subr.mxu0 0.0
    %473 = vmatpush1.msra.mxu0 0.0
    %474 = vmatprep.subr.mxu0 0.0
    %475 = vmatpush1.msra.mxu0 0.0
    %476 = vmatprep.subr.mxu0 0.0
    %477 = vmatpush1.msra.mxu0 0.0
    %478 = vmatprep.subr.mxu0 0.0
    %479 = vmatpush1.msra.mxu0 0.0
    %480 = vmatprep.subr.mxu0 0.0
    %481 = vmatpush1.msra.mxu0 0.0
    %482 = vmatprep.subr.mxu0 0.0
    %483 = vmatpush1.msra.mxu0 0.0
    %484 = vmatprep.subr.mxu0 0.0
    %485 = vmatpush1.msra.mxu0 0.0
    %486 = vmatprep.mubr.f32.mxu0 %v412
    %487 = vmatmul.mubr.f32.gmra.mrb[0].mxu0 %v384
    %v488 = vpop.f32.mrb[0].mxu0
    %v489 = vadd.f32 0.0, %v488
    %v490 = vpop.f32.mrb[0].mxu0
    %491 = vmatprep.mubr.f32.mxu0 %v415
    %492 = vmatmul.mubr.f32.gmra.mrb[0].mxu0 %v385
    %v493 = vpop.f32.mrb[0].mxu0
    %v494 = vadd.f32 0.0, %v493
    %v495 = vpop.f32.mrb[0].mxu0
    %496 = vmatprep.mubr.f32.mxu0 %v417
    %497 = vmatmul.mubr.f32.gmra.mrb[0].mxu0 %v386
    %v498 = vpop.f32.mrb[0].mxu0
    %v499 = vadd.f32 0.0, %v498
    %v500 = vpop.f32.mrb[0].mxu0
    %501 = vmatprep.mubr.f32.mxu0 %v420
    %502 = vmatmul.mubr.f32.gmra.mrb[0].mxu0 %v387
    %v503 = vpop.f32.mrb[0].mxu0
    %v504 = vadd.f32 0.0, %v503
    %v505 = vpop.f32.mrb[0].mxu0
    %506 = vdwg.mxu0
    %v507 = vadd.f32 %v489, %v494
    %v508 = vadd.f32 %v507, %v499
    %v509 = vadd.f32 %v508, %v504
    %v510 = vrot.slane %v509, 4
    %v511 = vadd.f32 %v509, %v510
    %v512 = vrot.slane %v511, 2
    %v513 = vadd.f32 %v511, %v512
    %v514 = vrot.slane %v513, 1
    %v515 = vadd.f32 %v513, %v514
    %516 = vmatprep.subr.mxu0 0.0
    %517 = vmatpush1.msra.mxu0 %v323
    %518 = vmatprep.subr.mxu0 0.0
    %519 = vmatpush1.msra.mxu0 %v324
    %520 = vmatprep.subr.mxu0 0.0
    %521 = vmatpush1.msra.mxu0 %v325
    %522 = vmatprep.subr.mxu0 0.0
    %523 = vmatpush1.msra.mxu0 %v326
    %524 = vmatprep.subr.mxu0 0.0
    %525 = vmatpush1.msra.mxu0 %v327
    %526 = vmatprep.subr.mxu0 0.0
    %527 = vmatpush1.msra.mxu0 %v328
    %528 = vmatprep.subr.mxu0 0.0
    %529 = vmatpush1.msra.mxu0 %v329
    %530 = vmatprep.subr.mxu0 0.0
    %531 = vmatpush1.msra.mxu0 %v330
    %532 = vmatprep.subr.mxu0 0.0
    %533 = vmatpush1.msra.mxu0 %v331
    %534 = vmatprep.subr.mxu0 0.0
    %535 = vmatpush1.msra.mxu0 %v332
    %536 = vmatprep.subr.mxu0 0.0
    %537 = vmatpush1.msra.mxu0 %v333
    %538 = vmatprep.subr.mxu0 0.0
    %539 = vmatpush1.msra.mxu0 %v334
    %540 = vmatprep.subr.mxu0 0.0
    %541 = vmatpush1.msra.mxu0 %v335
    %542 = vmatprep.subr.mxu0 0.0
    %543 = vmatpush1.msra.mxu0 %v336
    %544 = vmatprep.subr.mxu0 0.0
    %545 = vmatpush1.msra.mxu0 %v337
    %546 = vmatprep.subr.mxu0 0.0
    %547 = vmatpush1.msra.mxu0 %v338
    %548 = vmatprep.subr.mxu0 0.0
    %549 = vmatpush1.msra.mxu0 0.0
    %550 = vmatprep.subr.mxu0 0.0
    %551 = vmatpush1.msra.mxu0 0.0
    %552 = vmatprep.subr.mxu0 0.0
    %553 = vmatpush1.msra.mxu0 0.0
    %554 = vmatprep.subr.mxu0 0.0
    %555 = vmatpush1.msra.mxu0 0.0
    %556 = vmatprep.subr.mxu0 0.0
    %557 = vmatpush1.msra.mxu0 0.0
    %558 = vmatprep.subr.mxu0 0.0
    %559 = vmatpush1.msra.mxu0 0.0
    %560 = vmatprep.subr.mxu0 0.0
    %561 = vmatpush1.msra.mxu0 0.0
    %562 = vmatprep.subr.mxu0 0.0
    %563 = vmatpush1.msra.mxu0 0.0
    %564 = vmatprep.subr.mxu0 0.0
    %565 = vmatpush1.msra.mxu0 0.0
    %566 = vmatprep.subr.mxu0 0.0
    %567 = vmatpush1.msra.mxu0 0.0
    %568 = vmatprep.subr.mxu0 0.0
    %569 = vmatpush1.msra.mxu0 0.0
    %570 = vmatprep.subr.mxu0 0.0
    %571 = vmatpush1.msra.mxu0 0.0
    %572 = vmatprep.subr.mxu0 0.0
    %573 = vmatpush1.msra.mxu0 0.0
    %574 = vmatprep.subr.mxu0 0.0
    %575 = vmatpush1.msra.mxu0 0.0
    %576 = vmatprep.subr.mxu0 0.0
    %577 = vmatpush1.msra.mxu0 0.0
    %578 = vmatprep.subr.mxu0 0.0
    %579 = vmatpush1.msra.mxu0 0.0
    %580 = vmatprep.mubr.f32.mxu0 0.0
    %581 = vmatmul.mubr.f32.gmra.mrb[0].mxu0 %v515
    %v582 = vpop.f32.mrb[0].mxu0
    %v583 = vadd.f32 0.0, %v582
    %v584 = vpop.f32.mrb[0].mxu0
    %585 = vdwg.mxu0
    %v586 = vmul.f32 %v583, 0.001953125
    %v587 = vlaneseq
    %v588 = vshrl.u32 %v587, 7
    %v589 = vsub.s32 0, %v588
    %v590 = vrot.slane %v586, %v589
    %v591 = vsub.f32 %v489, %v590
    %v592 = vsub.f32 %v494, %v590
    %v593 = vsub.f32 %v499, %v590
    %v594 = vsub.f32 %v504, %v590
    %v595 = vmul.f32 %v591, %v591
    %v596 = vmul.f32 %v592, %v592
    %v597 = vmul.f32 %v593, %v593
    %v598 = vmul.f32 %v594, %v594
    %v599 = vadd.f32 %v595, %v596
    %v600 = vadd.f32 %v599, %v597
    %v601 = vadd.f32 %v600, %v598
    %v602 = vrot.slane %v601, 4
    %v603 = vadd.f32 %v601, %v602
    %v604 = vrot.slane %v603, 2
    %v605 = vadd.f32 %v603, %v604
    %v606 = vrot.slane %v605, 1
    %v607 = vadd.f32 %v605, %v606
    %608 = vmatprep.subr.mxu0 0.0
    %609 = vmatpush1.msra.mxu0 %v323
    %610 = vmatprep.subr.mxu0 0.0
    %611 = vmatpush1.msra.mxu0 %v324
    %612 = vmatprep.subr.mxu0 0.0
    %613 = vmatpush1.msra.mxu0 %v325
    %614 = vmatprep.subr.mxu0 0.0
    %615 = vmatpush1.msra.mxu0 %v326
    %616 = vmatprep.subr.mxu0 0.0
    %617 = vmatpush1.msra.mxu0 %v327
    %618 = vmatprep.subr.mxu0 0.0
    %619 = vmatpush1.msra.mxu0 %v328
    %620 = vmatprep.subr.mxu0 0.0
    %621 = vmatpush1.msra.mxu0 %v329
    %622 = vmatprep.subr.mxu0 0.0
    %623 = vmatpush1.msra.mxu0 %v330
    %624 = vmatprep.subr.mxu0 0.0
    %625 = vmatpush1.msra.mxu0 %v331
    %626 = vmatprep.subr.mxu0 0.0
    %627 = vmatpush1.msra.mxu0 %v332
    %628 = vmatprep.subr.mxu0 0.0
    %629 = vmatpush1.msra.mxu0 %v333
    %630 = vmatprep.subr.mxu0 0.0
    %631 = vmatpush1.msra.mxu0 %v334
    %632 = vmatprep.subr.mxu0 0.0
    %633 = vmatpush1.msra.mxu0 %v335
    %634 = vmatprep.subr.mxu0 0.0
    %635 = vmatpush1.msra.mxu0 %v336
    %636 = vmatprep.subr.mxu0 0.0
    %637 = vmatpush1.msra.mxu0 %v337
    %638 = vmatprep.subr.mxu0 0.0
    %639 = vmatpush1.msra.mxu0 %v338
    %640 = vmatprep.subr.mxu0 0.0
    %641 = vmatpush1.msra.mxu0 0.0
    %642 = vmatprep.subr.mxu0 0.0
    %643 = vmatpush1.msra.mxu0 0.0
    %644 = vmatprep.subr.mxu0 0.0
    %645 = vmatpush1.msra.mxu0 0.0
    %646 = vmatprep.subr.mxu0 0.0
    %647 = vmatpush1.msra.mxu0 0.0
    %648 = vmatprep.subr.mxu0 0.0
    %649 = vmatpush1.msra.mxu0 0.0
    %650 = vmatprep.subr.mxu0 0.0
    %651 = vmatpush1.msra.mxu0 0.0
    %652 = vmatprep.subr.mxu0 0.0
    %653 = vmatpush1.msra.mxu0 0.0
    %654 = vmatprep.subr.mxu0 0.0
    %655 = vmatpush1.msra.mxu0 0.0
    %656 = vmatprep.subr.mxu0 0.0
    %657 = vmatpush1.msra.mxu0 0.0
    %658 = vmatprep.subr.mxu0 0.0
    %659 = vmatpush1.msra.mxu0 0.0
    %660 = vmatprep.subr.mxu0 0.0
    %661 = vmatpush1.msra.mxu0 0.0
    %662 = vmatprep.subr.mxu0 0.0
    %663 = vmatpush1.msra.mxu0 0.0
    %664 = vmatprep.subr.mxu0 0.0
    %665 = vmatpush1.msra.mxu0 0.0
    %666 = vmatprep.subr.mxu0 0.0
    %667 = vmatpush1.msra.mxu0 0.0
    %668 = vmatprep.subr.mxu0 0.0
    %669 = vmatpush1.msra.mxu0 0.0
    %670 = vmatprep.subr.mxu0 0.0
    %671 = vmatpush1.msra.mxu0 0.0
    %672 = vmatprep.mubr.f32.mxu0 0.0
    %673 = vmatmul.mubr.f32.gmra.mrb[0].mxu0 %v607
    %v674 = vpop.f32.mrb[0].mxu0
    %v675 = vadd.f32 0.0, %v674
    %v676 = vpop.f32.mrb[0].mxu0
    %677 = vdwg.mxu0
    %v678 = vmul.f32 %v675, 0.001953125
    %v679 = vadd.f32 %v678, 1e-05
    %v680 = vrsqrt.pop %v679
    %v681 = vlaneseq
    %v682 = vshrl.u32 %v681, 7
    %v683 = vsub.s32 0, %v682
    %v684 = vrot.slane %v680, %v683
    %v685 = vmul.f32 %v591, %v684
    %v686 = vmul.f32 %v592, %v684
    %v687 = vmul.f32 %v593, %v684
    %v688 = vmul.f32 %v594, %v684
    %v689 = vld [vmem:[%s2] sm:$0x1]
    %v691 = vlaneseq
    %v692 = vshrl.u32 %v691, 7
    %v693 = vsub.s32 0, %v692
    %v694 = vrot.slane %v689, %v693
    %v696 = vmul.f32 %v685, %v694
    %v697 = vmul.f32 %v686, %v694
    %v698 = vmul.f32 %v687, %v694
    %v699 = vmul.f32 %v688, %v694
    %v700 = vld [vmem:[%s3] sm:$0x1]
    %v702 = vlaneseq
    %v703 = vshrl.u32 %v702, 7
    %v704 = vsub.s32 0, %v703
    %v705 = vrot.slane %v700, %v704
    %v707 = vadd.f32 %v696, %v705
    %v708 = vadd.f32 %v697, %v705
    %v709 = vadd.f32 %v698, %v705
    %v710 = vadd.f32 %v699, %v705
    %v711 = vmax.f32 %v707, 0.0
    %v712 = vmax.f32 %v708, 0.0
    %v713 = vmax.f32 %v709, 0.0
    %v714 = vmax.f32 %v710, 0.0
    %v719 = vrot.slane %v711, 7
    %v720 = vrot.slane %v712, 7
    %v721 = vsel %vm347, %v719, %v720
    %v722 = vrot.slane %v713, 7
    %v723 = vrot.slane %v714, 7
    %v724 = vsel %vm347, %v722, %v723
    %v729 = vsel %vm347, 0.0, %v719
    %v730 = vsel %vm347, 0.0, %v722
    %v731 = vrot.slane %v711, 1
    %v732 = vrot.slane %v712, 1
    %v733 = vsel %vm360, %v731, %v732
    %v734 = vrot.slane %v713, 1
    %v735 = vrot.slane %v714, 1
    %v736 = vsel %vm360, %v734, %v735
    %v741 = vsel %vm360, %v732, 0.0
    %v742 = vsel %vm360, %v735, 0.0
    %v743 = vld [vmem:[#allocation7] sm:$0xff]
    %v744 = vld [vmem:[#allocation7 + $0x8] sm:$0xff]
    %v745 = vld [vmem:[#allocation7 + $0x10] sm:$0xff]
    %v746 = vld [vmem:[#allocation7 + $0x18] sm:$0xff]
    %v747 = vld [vmem:[#allocation7 + $0x20] sm:$0xff]
    %v748 = vld [vmem:[#allocation7 + $0x28] sm:$0xff]
    %v749 = vld [vmem:[#allocation7 + $0x30] sm:$0xff]
    %v750 = vld [vmem:[#allocation7 + $0x38] sm:$0xff]
    %v751 = vld [vmem:[#allocation7 + $0x40] sm:$0xff]
    %v752 = vld [vmem:[#allocation7 + $0x48] sm:$0xff]
    %v753 = vld [vmem:[#allocation7 + $0x50] sm:$0xff]
    %v754 = vld [vmem:[#allocation7 + $0x58] sm:$0xff]
    %v755 = vld [vmem:[#allocation7 + $0x60] sm:$0xff]
    %v756 = vld [vmem:[#allocation7 + $0x68] sm:$0xff]
    %v757 = vld [vmem:[#allocation7 + $0x70] sm:$0xff]
    %v758 = vld [vmem:[#allocation7 + $0x78] sm:$0xff]
    %v759 = vld [vmem:[#allocation7 + $0x80] sm:$0xff]
    %v760 = vld [vmem:[#allocation7 + $0x88] sm:$0xff]
    %v761 = vld [vmem:[#allocation7 + $0x90] sm:$0xff]
    %v762 = vld [vmem:[#allocation7 + $0x98] sm:$0xff]
    %v763 = vld [vmem:[#allocation7 + $0xa0] sm:$0xff]
    %v764 = vld [vmem:[#allocation7 + $0xa8] sm:$0xff]
    %v765 = vld [vmem:[#allocation7 + $0xb0] sm:$0xff]
    %v766 = vld [vmem:[#allocation7 + $0xb8] sm:$0xff]
    %v767 = vld [vmem:[#allocation7 + $0xc0] sm:$0xff]
    %v768 = vld [vmem:[#allocation7 + $0xc8] sm:$0xff]
    %v769 = vld [vmem:[#allocation7 + $0xd0] sm:$0xff]
    %v770 = vld [vmem:[#allocation7 + $0xd8] sm:$0xff]
    %v771 = vld [vmem:[#allocation7 + $0xe0] sm:$0xff]
    %v772 = vld [vmem:[#allocation7 + $0xe8] sm:$0xff]
    %v773 = vld [vmem:[#allocation7 + $0xf0] sm:$0xff]
    %v774 = vld [vmem:[#allocation7 + $0xf8] sm:$0xff]
    %v775 = vld [vmem:[#allocation7 + $0x100] sm:$0xff]
    %v776 = vld [vmem:[#allocation7 + $0x108] sm:$0xff]
    %v777 = vld [vmem:[#allocation7 + $0x110] sm:$0xff]
    %v778 = vld [vmem:[#allocation7 + $0x118] sm:$0xff]
    %v779 = vld [vmem:[#allocation7 + $0x120] sm:$0xff]
    %v780 = vld [vmem:[#allocation7 + $0x128] sm:$0xff]
    %v781 = vld [vmem:[#allocation7 + $0x130] sm:$0xff]
    %v782 = vld [vmem:[#allocation7 + $0x138] sm:$0xff]
    %v783 = vld [vmem:[#allocation7 + $0x140] sm:$0xff]
    %v784 = vld [vmem:[#allocation7 + $0x148] sm:$0xff]
    %v785 = vld [vmem:[#allocation7 + $0x150] sm:$0xff]
    %v786 = vld [vmem:[#allocation7 + $0x158] sm:$0xff]
    %v787 = vld [vmem:[#allocation7 + $0x160] sm:$0xff]
    %v788 = vld [vmem:[#allocation7 + $0x168] sm:$0xff]
    %v789 = vld [vmem:[#allocation7 + $0x170] sm:$0xff]
    %v790 = vld [vmem:[#allocation7 + $0x178] sm:$0xff]
    %791 = vmatprep.subr.mxu0 0.0
    %792 = vmatpush1.msra.mxu0 %v743
    %793 = vmatprep.subr.mxu0 0.0
    %794 = vmatpush1.msra.mxu0 %v744
    %795 = vmatprep.subr.mxu0 0.0
    %796 = vmatpush1.msra.mxu0 %v745
    %797 = vmatprep.subr.mxu0 0.0
    %798 = vmatpush1.msra.mxu0 %v746
    %799 = vmatprep.subr.mxu0 0.0
    %800 = vmatpush1.msra.mxu0 %v747
    %801 = vmatprep.subr.mxu0 0.0
    %802 = vmatpush1.msra.mxu0 %v748
    %803 = vmatprep.subr.mxu0 0.0
    %804 = vmatpush1.msra.mxu0 %v749
    %805 = vmatprep.subr.mxu0 0.0
    %806 = vmatpush1.msra.mxu0 %v750
    %807 = vmatprep.subr.mxu0 0.0
    %808 = vmatpush1.msra.mxu0 %v751
    %809 = vmatprep.subr.mxu0 0.0
    %810 = vmatpush1.msra.mxu0 %v752
    %811 = vmatprep.subr.mxu0 0.0
    %812 = vmatpush1.msra.mxu0 %v753
    %813 = vmatprep.subr.mxu0 0.0
    %814 = vmatpush1.msra.mxu0 %v754
    %815 = vmatprep.subr.mxu0 0.0
    %816 = vmatpush1.msra.mxu0 %v755
    %817 = vmatprep.subr.mxu0 0.0
    %818 = vmatpush1.msra.mxu0 %v756
    %819 = vmatprep.subr.mxu0 0.0
    %820 = vmatpush1.msra.mxu0 %v757
    %821 = vmatprep.subr.mxu0 0.0
    %822 = vmatpush1.msra.mxu0 %v758
    %823 = vmatprep.subr.mxu0 0.0
    %824 = vmatpush1.msra.mxu0 %v759
    %825 = vmatprep.subr.mxu0 0.0
    %826 = vmatpush1.msra.mxu0 %v760
    %827 = vmatprep.subr.mxu0 0.0
    %828 = vmatpush1.msra.mxu0 %v761
    %829 = vmatprep.subr.mxu0 0.0
    %830 = vmatpush1.msra.mxu0 %v762
    %831 = vmatprep.subr.mxu0 0.0
    %832 = vmatpush1.msra.mxu0 %v763
    %833 = vmatprep.subr.mxu0 0.0
    %834 = vmatpush1.msra.mxu0 %v764
    %835 = vmatprep.subr.mxu0 0.0
    %836 = vmatpush1.msra.mxu0 %v765
    %837 = vmatprep.subr.mxu0 0.0
    %838 = vmatpush1.msra.mxu0 %v766
    %839 = vmatprep.subr.mxu0 0.0
    %840 = vmatpush1.msra.mxu0 %v767
    %841 = vmatprep.subr.mxu0 0.0
    %842 = vmatpush1.msra.mxu0 %v768
    %843 = vmatprep.subr.mxu0 0.0
    %844 = vmatpush1.msra.mxu0 %v769
    %845 = vmatprep.subr.mxu0 0.0
    %846 = vmatpush1.msra.mxu0 %v770
    %847 = vmatprep.subr.mxu0 0.0
    %848 = vmatpush1.msra.mxu0 %v771
    %849 = vmatprep.subr.mxu0 0.0
    %850 = vmatpush1.msra.mxu0 %v772
    %851 = vmatprep.subr.mxu0 0.0
    %852 = vmatpush1.msra.mxu0 %v773
    %853 = vmatprep.subr.mxu0 0.0
    %854 = vmatpush1.msra.mxu0 %v774
    %855 = vmatprep.mubr.f32.mxu0 %v711
    %856 = vmatmul.mubr.f32.gmra.mrb[0].mxu0 %v729
    %v857 = vpop.f32.mrb[0].mxu0
    %v858 = vadd.f32 0.0, %v857
    %v859 = vpop.f32.mrb[0].mxu0
    %860 = vmatprep.mubr.f32.mxu0 %v712
    %861 = vmatmul.mubr.f32.gmra.mrb[0].mxu0 %v721
    %v862 = vpop.f32.mrb[0].mxu0
    %v863 = vadd.f32 0.0, %v862
    %v864 = vpop.f32.mrb[0].mxu0
    %865 = vmatprep.mubr.f32.mxu0 %v713
    %866 = vmatmul.mubr.f32.gmra.mrb[0].mxu0 %v730
    %v867 = vpop.f32.mrb[0].mxu0
    %v868 = vadd.f32 0.0, %v867
    %v869 = vpop.f32.mrb[0].mxu0
    %870 = vmatprep.mubr.f32.mxu0 %v714
    %871 = vmatmul.mubr.f32.gmra.mrb[0].mxu0 %v724
    %v872 = vpop.f32.mrb[0].mxu0
    %v873 = vadd.f32 0.0, %v872
    %v874 = vpop.f32.mrb[0].mxu0
    %875 = vdwg.mxu0
    %876 = vmatprep.subr.mxu0 0.0
    %877 = vmatpush1.msra.mxu0 %v775
    %878 = vmatprep.subr.mxu0 0.0
    %879 = vmatpush1.msra.mxu0 %v776
    %880 = vmatprep.subr.mxu0 0.0
    %881 = vmatpush1.msra.mxu0 %v777
    %882 = vmatprep.subr.mxu0 0.0
    %883 = vmatpush1.msra.mxu0 %v778
    %884 = vmatprep.subr.mxu0 0.0
    %885 = vmatpush1.msra.mxu0 %v779
    %886 = vmatprep.subr.mxu0 0.0
    %887 = vmatpush1.msra.mxu0 %v780
    %888 = vmatprep.subr.mxu0 0.0
    %889 = vmatpush1.msra.mxu0 %v781
    %890 = vmatprep.subr.mxu0 0.0
    %891 = vmatpush1.msra.mxu0 %v782
    %892 = vmatprep.subr.mxu0 0.0
    %893 = vmatpush1.msra.mxu0 %v783
    %894 = vmatprep.subr.mxu0 0.0
    %895 = vmatpush1.msra.mxu0 %v784
    %896 = vmatprep.subr.mxu0 0.0
    %897 = vmatpush1.msra.mxu0 %v785
    %898 = vmatprep.subr.mxu0 0.0
    %899 = vmatpush1.msra.mxu0 %v786
    %900 = vmatprep.subr.mxu0 0.0
    %901 = vmatpush1.msra.mxu0 %v787
    %902 = vmatprep.subr.mxu0 0.0
    %903 = vmatpush1.msra.mxu0 %v788
    %904 = vmatprep.subr.mxu0 0.0
    %905 = vmatpush1.msra.mxu0 %v789
    %906 = vmatprep.subr.mxu0 0.0
    %907 = vmatpush1.msra.mxu0 %v790
    %908 = vmatprep.subr.mxu0 0.0
    %909 = vmatpush1.msra.mxu0 0.0
    %910 = vmatprep.subr.mxu0 0.0
    %911 = vmatpush1.msra.mxu0 0.0
    %912 = vmatprep.subr.mxu0 0.0
    %913 = vmatpush1.msra.mxu0 0.0
    %914 = vmatprep.subr.mxu0 0.0
    %915 = vmatpush1.msra.mxu0 0.0
    %916 = vmatprep.subr.mxu0 0.0
    %917 = vmatpush1.msra.mxu0 0.0
    %918 = vmatprep.subr.mxu0 0.0
    %919 = vmatpush1.msra.mxu0 0.0
    %920 = vmatprep.subr.mxu0 0.0
    %921 = vmatpush1.msra.mxu0 0.0
    %922 = vmatprep.subr.mxu0 0.0
    %923 = vmatpush1.msra.mxu0 0.0
    %924 = vmatprep.subr.mxu0 0.0
    %925 = vmatpush1.msra.mxu0 0.0
    %926 = vmatprep.subr.mxu0 0.0
    %927 = vmatpush1.msra.mxu0 0.0
    %928 = vmatprep.subr.mxu0 0.0
    %929 = vmatpush1.msra.mxu0 0.0
    %930 = vmatprep.subr.mxu0 0.0
    %931 = vmatpush1.msra.mxu0 0.0
    %932 = vmatprep.subr.mxu0 0.0
    %933 = vmatpush1.msra.mxu0 0.0
    %934 = vmatprep.subr.mxu0 0.0
    %935 = vmatpush1.msra.mxu0 0.0
    %936 = vmatprep.subr.mxu0 0.0
    %937 = vmatpush1.msra.mxu0 0.0
    %938 = vmatprep.subr.mxu0 0.0
    %939 = vmatpush1.msra.mxu0 0.0
    %940 = vmatprep.mubr.f32.mxu0 0.0
    %941 = vmatmul.mubr.f32.gmra.mrb[0].mxu0 %v733
    %v942 = vpop.f32.mrb[0].mxu0
    %v943 = vadd.f32 %v858, %v942
    %v944 = vpop.f32.mrb[0].mxu0
    %945 = vmatprep.mubr.f32.mxu0 0.0
    %946 = vmatmul.mubr.f32.gmra.mrb[0].mxu0 %v741
    %v947 = vpop.f32.mrb[0].mxu0
    %v948 = vadd.f32 %v863, %v947
    %v949 = vpop.f32.mrb[0].mxu0
    %950 = vmatprep.mubr.f32.mxu0 0.0
    %951 = vmatmul.mubr.f32.gmra.mrb[0].mxu0 %v736
    %v952 = vpop.f32.mrb[0].mxu0
    %v953 = vadd.f32 %v868, %v952
    %v954 = vpop.f32.mrb[0].mxu0
    %955 = vmatprep.mubr.f32.mxu0 0.0
    %956 = vmatmul.mubr.f32.gmra.mrb[0].mxu0 %v742
    %v957 = vpop.f32.mrb[0].mxu0
    %v958 = vadd.f32 %v873, %v957
    %v959 = vpop.f32.mrb[0].mxu0
    %960 = vdwg.mxu0
    %v961 = vadd.f32 %v943, %v948
    %v962 = vadd.f32 %v961, %v953
    %v963 = vadd.f32 %v962, %v958
    %v964 = vrot.slane %v963, 4
    %v965 = vadd.f32 %v963, %v964
    %v966 = vrot.slane %v965, 2
    %v967 = vadd.f32 %v965, %v966
    %v968 = vrot.slane %v967, 1
    %v969 = vadd.f32 %v967, %v968
    %970 = vmatprep.subr.mxu0 0.0
    %971 = vmatpush1.msra.mxu0 %v323
    %972 = vmatprep.subr.mxu0 0.0
    %973 = vmatpush1.msra.mxu0 %v324
    %974 = vmatprep.subr.mxu0 0.0
    %975 = vmatpush1.msra.mxu0 %v325
    %976 = vmatprep.subr.mxu0 0.0
    %977 = vmatpush1.msra.mxu0 %v326
    %978 = vmatprep.subr.mxu0 0.0
    %979 = vmatpush1.msra.mxu0 %v327
    %980 = vmatprep.subr.mxu0 0.0
    %981 = vmatpush1.msra.mxu0 %v328
    %982 = vmatprep.subr.mxu0 0.0
    %983 = vmatpush1.msra.mxu0 %v329
    %984 = vmatprep.subr.mxu0 0.0
    %985 = vmatpush1.msra.mxu0 %v330
    %986 = vmatprep.subr.mxu0 0.0
    %987 = vmatpush1.msra.mxu0 %v331
    %988 = vmatprep.subr.mxu0 0.0
    %989 = vmatpush1.msra.mxu0 %v332
    %990 = vmatprep.subr.mxu0 0.0
    %991 = vmatpush1.msra.mxu0 %v333
    %992 = vmatprep.subr.mxu0 0.0
    %993 = vmatpush1.msra.mxu0 %v334
    %994 = vmatprep.subr.mxu0 0.0
    %995 = vmatpush1.msra.mxu0 %v335
    %996 = vmatprep.subr.mxu0 0.0
    %997 = vmatpush1.msra.mxu0 %v336
    %998 = vmatprep.subr.mxu0 0.0
    %999 = vmatpush1.msra.mxu0 %v337
    %1000 = vmatprep.subr.mxu0 0.0
    %1001 = vmatpush1.msra.mxu0 %v338
    %1002 = vmatprep.subr.mxu0 0.0
    %1003 = vmatpush1.msra.mxu0 0.0
    %1004 = vmatprep.subr.mxu0 0.0
    %1005 = vmatpush1.msra.mxu0 0.0
    %1006 = vmatprep.subr.mxu0 0.0
    %1007 = vmatpush1.msra.mxu0 0.0
    %1008 = vmatprep.subr.mxu0 0.0
    %1009 = vmatpush1.msra.mxu0 0.0
    %1010 = vmatprep.subr.mxu0 0.0
    %1011 = vmatpush1.msra.mxu0 0.0
    %1012 = vmatprep.subr.mxu0 0.0
    %1013 = vmatpush1.msra.mxu0 0.0
    %1014 = vmatprep.subr.mxu0 0.0
    %1015 = vmatpush1.msra.mxu0 0.0
    %1016 = vmatprep.subr.mxu0 0.0
    %1017 = vmatpush1.msra.mxu0 0.0
    %1018 = vmatprep.subr.mxu0 0.0
    %1019 = vmatpush1.msra.mxu0 0.0
    %1020 = vmatprep.subr.mxu0 0.0
    %1021 = vmatpush1.msra.mxu0 0.0
    %1022 = vmatprep.subr.mxu0 0.0
    %1023 = vmatpush1.msra.mxu0 0.0
    %1024 = vmatprep.subr.mxu0 0.0
    %1025 = vmatpush1.msra.mxu0 0.0
    %1026 = vmatprep.subr.mxu0 0.0
    %1027 = vmatpush1.msra.mxu0 0.0
    %1028 = vmatprep.subr.mxu0 0.0
    %1029 = vmatpush1.msra.mxu0 0.0
    %1030 = vmatprep.subr.mxu0 0.0
    %1031 = vmatpush1.msra.mxu0 0.0
    %1032 = vmatprep.subr.mxu0 0.0
    %1033 = vmatpush1.msra.mxu0 0.0
    %1034 = vmatprep.mubr.f32.mxu0 0.0
    %1035 = vmatmul.mubr.f32.gmra.mrb[0].mxu0 %v969
    %v1036 = vpop.f32.mrb[0].mxu0
    %v1037 = vadd.f32 0.0, %v1036
    %v1038 = vpop.f32.mrb[0].mxu0
    %1039 = vdwg.mxu0
    %v1040 = vmul.f32 %v1037, 0.001953125
    %v1041 = vlaneseq
    %v1042 = vshrl.u32 %v1041, 7
    %v1043 = vsub.s32 0, %v1042
    %v1044 = vrot.slane %v1040, %v1043
    %v1045 = vsub.f32 %v943, %v1044
    %v1046 = vsub.f32 %v948, %v1044
    %v1047 = vsub.f32 %v953, %v1044
    %v1048 = vsub.f32 %v958, %v1044
    %v1049 = vmul.f32 %v1045, %v1045
    %v1050 = vmul.f32 %v1046, %v1046
    %v1051 = vmul.f32 %v1047, %v1047
    %v1052 = vmul.f32 %v1048, %v1048
    %v1053 = vadd.f32 %v1049, %v1050
    %v1054 = vadd.f32 %v1053, %v1051
    %v1055 = vadd.f32 %v1054, %v1052
    %v1056 = vrot.slane %v1055, 4
    %v1057 = vadd.f32 %v1055, %v1056
    %v1058 = vrot.slane %v1057, 2
    %v1059 = vadd.f32 %v1057, %v1058
    %v1060 = vrot.slane %v1059, 1
    %v1061 = vadd.f32 %v1059, %v1060
    %1062 = vmatprep.subr.mxu0 0.0
    %1063 = vmatpush1.msra.mxu0 %v323
    %1064 = vmatprep.subr.mxu0 0.0
    %1065 = vmatpush1.msra.mxu0 %v324
    %1066 = vmatprep.subr.mxu0 0.0
    %1067 = vmatpush1.msra.mxu0 %v325
    %1068 = vmatprep.subr.mxu0 0.0
    %1069 = vmatpush1.msra.mxu0 %v326
    %1070 = vmatprep.subr.mxu0 0.0
    %1071 = vmatpush1.msra.mxu0 %v327
    %1072 = vmatprep.subr.mxu0 0.0
    %1073 = vmatpush1.msra.mxu0 %v328
    %1074 = vmatprep.subr.mxu0 0.0
    %1075 = vmatpush1.msra.mxu0 %v329
    %1076 = vmatprep.subr.mxu0 0.0
    %1077 = vmatpush1.msra.mxu0 %v330
    %1078 = vmatprep.subr.mxu0 0.0
    %1079 = vmatpush1.msra.mxu0 %v331
    %1080 = vmatprep.subr.mxu0 0.0
    %1081 = vmatpush1.msra.mxu0 %v332
    %1082 = vmatprep.subr.mxu0 0.0
    %1083 = vmatpush1.msra.mxu0 %v333
    %1084 = vmatprep.subr.mxu0 0.0
    %1085 = vmatpush1.msra.mxu0 %v334
    %1086 = vmatprep.subr.mxu0 0.0
    %1087 = vmatpush1.msra.mxu0 %v335
    %1088 = vmatprep.subr.mxu0 0.0
    %1089 = vmatpush1.msra.mxu0 %v336
    %1090 = vmatprep.subr.mxu0 0.0
    %1091 = vmatpush1.msra.mxu0 %v337
    %1092 = vmatprep.subr.mxu0 0.0
    %1093 = vmatpush1.msra.mxu0 %v338
    %1094 = vmatprep.subr.mxu0 0.0
    %1095 = vmatpush1.msra.mxu0 0.0
    %1096 = vmatprep.subr.mxu0 0.0
    %1097 = vmatpush1.msra.mxu0 0.0
    %1098 = vmatprep.subr.mxu0 0.0
    %1099 = vmatpush1.msra.mxu0 0.0
    %1100 = vmatprep.subr.mxu0 0.0
    %1101 = vmatpush1.msra.mxu0 0.0
    %1102 = vmatprep.subr.mxu0 0.0
    %1103 = vmatpush1.msra.mxu0 0.0
    %1104 = vmatprep.subr.mxu0 0.0
    %1105 = vmatpush1.msra.mxu0 0.0
    %1106 = vmatprep.subr.mxu0 0.0
    %1107 = vmatpush1.msra.mxu0 0.0
    %1108 = vmatprep.subr.mxu0 0.0
    %1109 = vmatpush1.msra.mxu0 0.0
    %1110 = vmatprep.subr.mxu0 0.0
    %1111 = vmatpush1.msra.mxu0 0.0
    %1112 = vmatprep.subr.mxu0 0.0
    %1113 = vmatpush1.msra.mxu0 0.0
    %1114 = vmatprep.subr.mxu0 0.0
    %1115 = vmatpush1.msra.mxu0 0.0
    %1116 = vmatprep.subr.mxu0 0.0
    %1117 = vmatpush1.msra.mxu0 0.0
    %1118 = vmatprep.subr.mxu0 0.0
    %1119 = vmatpush1.msra.mxu0 0.0
    %1120 = vmatprep.subr.mxu0 0.0
    %1121 = vmatpush1.msra.mxu0 0.0
    %1122 = vmatprep.subr.mxu0 0.0
    %1123 = vmatpush1.msra.mxu0 0.0
    %1124 = vmatprep.subr.mxu0 0.0
    %1125 = vmatpush1.msra.mxu0 0.0
    %1126 = vmatprep.mubr.f32.mxu0 0.0
    %1127 = vmatmul.mubr.f32.gmra.mrb[0].mxu0 %v1061
    %v1128 = vpop.f32.mrb[0].mxu0
    %v1129 = vadd.f32 0.0, %v1128
    %v1130 = vpop.f32.mrb[0].mxu0
    %1131 = vdwg.mxu0
    %v1132 = vmul.f32 %v1129, 0.001953125
    %v1133 = vadd.f32 %v1132, 1e-05
    %v1134 = vrsqrt.pop %v1133
    %v1135 = vlaneseq
    %v1136 = vshrl.u32 %v1135, 7
    %v1137 = vsub.s32 0, %v1136
    %v1138 = vrot.slane %v1134, %v1137
    %v1139 = vmul.f32 %v1045, %v1138
    %v1140 = vmul.f32 %v1046, %v1138
    %v1141 = vmul.f32 %v1047, %v1138
    %v1142 = vmul.f32 %v1048, %v1138
    %v1143 = vld [vmem:[%s5] sm:$0x1]
    %v1145 = vlaneseq
    %v1146 = vshrl.u32 %v1145, 7
    %v1147 = vsub.s32 0, %v1146
    %v1148 = vrot.slane %v1143, %v1147
    %v1150 = vmul.f32 %v1139, %v1148
    %v1151 = vmul.f32 %v1140, %v1148
    %v1152 = vmul.f32 %v1141, %v1148
    %v1153 = vmul.f32 %v1142, %v1148
    %v1154 = vld [vmem:[%s6] sm:$0x1]
    %v1156 = vlaneseq
    %v1157 = vshrl.u32 %v1156, 7
    %v1158 = vsub.s32 0, %v1157
    %v1159 = vrot.slane %v1154, %v1158
    %v1161 = vadd.f32 %v1150, %v1159
    %v1162 = vadd.f32 %v1151, %v1159
    %v1163 = vadd.f32 %v1152, %v1159
    %v1164 = vadd.f32 %v1153, %v1159
    %v1165 = vmax.f32 %v1161, 0.0
    %v1166 = vmax.f32 %v1162, 0.0
    %v1167 = vmax.f32 %v1163, 0.0
    %v1168 = vmax.f32 %v1164, 0.0
    %1169 = vst [vmem:[#allocation8] sm:$0xff] %v1165
    %1170 = vst [vmem:[#allocation8 + $0x8] sm:$0xff] %v1166
    %1171 = vst [vmem:[#allocation8 + $0x10] sm:$0xff] %v1167
    %1172 = vst [vmem:[#allocation8 + $0x18] sm:$0xff] %v1168
    // Predicated region
    $region42: #{tpu_custom_call.1} parent=1 // pred_check
      _
    $region43: #{tpu_custom_call.1} parent=1 // pred_check_branch
      %1174 = sbr.rel (0) target = $region45
    $region44: #{tpu_custom_call.1} parent=1 // pred_region
      %s1176 = ssub.s32 512, 512
      %1177 = vsyncadd [#allocation4], %s1176
      %s1178 = sshll.u32 [#allocation8], 4
      %s1179 = int_to_ptr.vmem [resolvable:$true] %s1178
      %1184 = dma.vmem_to_hbm [thread:$0]  %s1179, 512, %s7, [#allocation4], 128, 128, 8
    $region45: #{tpu_custom_call.1} parent=1 // pred_fallthru
      _
    // Predicated region
    $region46: #{tpu_custom_call.1} parent=1 // pred_check
      _
    $region47: #{tpu_custom_call.1} parent=1 // pred_check_branch
      %1186 = sbr.rel (0) target = $region49
    $region48: #{tpu_custom_call.1} parent=1 // pred_region
      %1187 = dma.done [#allocation4], 512
    $region49: #{tpu_custom_call.1} parent=1 // pred_fallthru
      _
    %1188 = vsyncpa [#allocation3], 1
    %1189 = vsyncpa [#allocation6], 1
    %1190 = vsyncpa [#allocation4], 1

</llo_original>
